<compile_context>
chip_gen: v5e
topology: v5e:2x2
jax: 0.10.0
libtpu: 0.0.40
codegen_flags: <defaults>
</compile_context>

<pallas_src>
import jax
import jax.numpy as jnp
from jax.experimental import pallas as pl
from jax.experimental.pallas import tpu as pltpu

_MIB = 1024 * 1024


def _round_up(x, m):
    return (x + m - 1) // m * m


def _pad2d(a, rows, cols):
    r, c = a.shape
    if r == rows and c == cols:
        return a
    return jnp.pad(a, ((0, rows - r), (0, cols - c)))


def _largest_dividing_tile(t, total, unit=128):
    """Largest multiple of `unit` <= t that divides `total` (total % unit == 0)."""
    t = max(unit, min(t, total))
    t = (t // unit) * unit
    while total % t:
        t -= unit
    return t


def _vmem_capacity_bytes():
    try:
        return pltpu.get_tpu_info().vmem_capacity_bytes
    except Exception:
        return 64 * _MIB  # conservative (v7x-class) fallback


# ----------------------------------------------------------------------------- kernels
def _theta_kernel(x_ref, w_ref, b_ref, o_ref):
    """One (tm, tn) output tile. The f32 output block is resident across the K
    grid axis and serves as the accumulator (no VMEM scratch, no epilogue copy)."""
    k = pl.program_id(2)

    @pl.when(k == 0)
    def _init():
        # Bias folded into the accumulator init: one broadcast per output tile.
        o_ref[...] = jnp.broadcast_to(b_ref[...], o_ref.shape).astype(o_ref.dtype)

    o_ref[...] += jnp.dot(
        x_ref[...], w_ref[...], preferred_element_type=jnp.float32
    ).astype(o_ref.dtype)


def _theta_single_kernel(x_ref, w_ref, b_ref, o_ref):
    """Whole problem fits a single tile: one MXU call, no grid / scratch / pl.when."""
    o_ref[...] = (
        jnp.dot(x_ref[...], w_ref[...], preferred_element_type=jnp.float32)
        + b_ref[...]
    ).astype(o_ref.dtype)


# ----------------------------------------------------------------------------- packing
def pack_theta_params(w, b, *, compute_dtype=jnp.bfloat16):
    """One-time packing of nn.Linear params (call once, reuse every forward).

    w : (H_out, H_in) f32  ->  (Kp, Np) compute_dtype   (transposed, lane-padded)
    b : (H_out,)      f32  ->  (1, Np)  f32
    """
    N, K = w.shape
    Kp = _round_up(K, 128)
    Np = _round_up(N, 128)
    wp = _pad2d(w.T.astype(compute_dtype), Kp, Np)
    bp = _pad2d(b.astype(jnp.float32).reshape(1, N), 1, Np)
    return wp, bp, (N, K)


# ----------------------------------------------------------------------------- forward
def theta_forward_packed(x, wp, bp, dims, *, tm=None, tn=None, tk=None,
                         compute_dtype=jnp.bfloat16, out_dtype=None):
    """nn.Linear forward using pre-packed weights: x @ W.T + b."""
    N, K = dims
    orig_shape = x.shape
    assert orig_shape[-1] == K, "last dim of x must equal H_in"
    x2 = x.reshape(-1, K)
    B = x2.shape[0]
    Kp, Np = wp.shape
    out_dtype = out_dtype or x.dtype
    # TODO(synk): if out_dtype is bf16, reintroduce an f32 VMEM scratch for the
    # K-axis accumulation before the final cast (f32 output accumulates exactly).

    vmem_cap = _vmem_capacity_bytes()
    big_vmem = vmem_cap >= 96 * _MIB  # v5e/v6e (128 MiB) vs v7x-class (64 MiB)

    # ---- defaults: big tiles, sized per generation ---------------------------
    tm_d = 512 if B >= 2048 else 256
    tn_d = 512
    tk_d = 1024 if big_vmem else 512

    # ---- single-block fast path for small layers -----------------------------
    Mp_small = _round_up(B, 16)
    if (tm is None and tn is None and tk is None
            and Mp_small <= 256 and Np <= 512 and Kp <= tk_d):
        xp = _pad2d(x2.astype(compute_dtype), Mp_small, Kp)
        out_p = pl.pallas_call(
            _theta_single_kernel,
            out_shape=jax.ShapeDtypeStruct((Mp_small, Np), out_dtype),
            in_specs=[pl.BlockSpec(memory_space=pltpu.MemorySpace.VMEM)] * 3,
            out_specs=pl.BlockSpec(memory_space=pltpu.MemorySpace.VMEM),
        )(xp, wp, bp)
        return out_p[:B, :N].reshape(orig_shape[:-1] + (N,))

    # ---- tiled (M, N, K) path -------------------------------------------------
    tm = tm_d if tm is None else tm
    tm = max(16, _round_up(min(tm, _round_up(B, 16)), 16))
    tn = _largest_dividing_tile(tn_d if tn is None else tn, Np)
    tk = _largest_dividing_tile(tk_d if tk is None else tk, Kp)
    Mp = _round_up(B, tm)

    # v7x-class parts have 2 TensorCores: keep >= 2 blocks on the parallel axes.
    if not big_vmem and (Mp // tm) * (Np // tn) < 2 and Np // 128 >= 2:
        tn = _largest_dividing_tile(tn // 2, Np)

    # Exact double-buffer VMEM accounting (+ compiler-internal headroom).
    in_item = jnp.dtype(compute_dtype).itemsize
    out_item = jnp.dtype(out_dtype).itemsize

    def footprint(_tm, _tn, _tk):
        return (2 * _tm * _tk * in_item        # x tiles (double-buffered)
                + 2 * _tk * _tn * in_item      # W tiles
                + 2 * 1 * _tn * 4              # bias tiles
                + 2 * _tm * _tn * out_item)    # output / accumulator tiles

    clamp = (96 if big_vmem else 40) * _MIB
    internal = 2 * _MIB
    while footprint(tm, tn, tk) + internal > clamp and tk > 128:
        tk = _largest_dividing_tile(tk // 2, Kp)
    vmem_limit = int(min(max(footprint(tm, tn, tk) + internal, 8 * _MIB), clamp))

    xp = _pad2d(x2.astype(compute_dtype), Mp, Kp)
    grid = (Mp // tm, Np // tn, Kp // tk)

    out_p = pl.pallas_call(
        _theta_kernel,
        out_shape=jax.ShapeDtypeStruct((Mp, Np), out_dtype),
        grid_spec=pltpu.PrefetchScalarGridSpec(
            num_scalar_prefetch=0,
            grid=grid,
            in_specs=[
                pl.BlockSpec((tm, tk), lambda i, j, k: (i, k)),   # x tile
                pl.BlockSpec((tk, tn), lambda i, j, k: (k, j)),   # pre-packed W.T tile
                pl.BlockSpec((1, tn), lambda i, j, k: (0, j)),    # bias tile
            ],
            out_specs=pl.BlockSpec((tm, tn), lambda i, j, k: (i, j)),
        ),
        compiler_params=pltpu.CompilerParams(
            dimension_semantics=("parallel", "parallel", "arbitrary"),
            vmem_limit_bytes=vmem_limit,
        ),
    )(xp, wp, bp)

    return out_p[:B, :N].reshape(orig_shape[:-1] + (N,))


def theta_forward(x, w, b, **kwargs):
    """Convenience wrapper (packs W each call). For repeated forwards, call
    pack_theta_params once and use theta_forward_packed."""
    compute_dtype = kwargs.get("compute_dtype", jnp.bfloat16)
    wp, bp, dims = pack_theta_params(w, b, compute_dtype=compute_dtype)
    return theta_forward_packed(x, wp, bp, dims, **kwargs)


# ----------------------------------------------------------------------------- test
if __name__ == "__main__":
    key = jax.random.PRNGKey(0)
    k_x, k_w, k_b, k_x2, k_w2, k_b2 = jax.random.split(key, 6)

    # --- small case (exercises the single-block fast path) -------------------
    B, H = 8, 32
    bound = 1.0 / jnp.sqrt(jnp.float32(H))
    w = jax.random.uniform(k_w, (H, H), jnp.float32, -bound, bound)  # (out, in)
    b = jax.random.uniform(k_b, (H,), jnp.float32, -bound, bound)
    x = jax.random.normal(k_x, (B, H), jnp.float32)

    wp, bp, dims = pack_theta_params(w, b)          # one-time weight packing
    out = theta_forward_packed(x, wp, bp, dims)
    jax.block_until_ready(out)
    assert out.shape == (B, H) and out.dtype == jnp.float32

    ref_bf16 = jnp.dot(x.astype(jnp.bfloat16).astype(jnp.float32),
                       w.T.astype(jnp.bfloat16).astype(jnp.float32)) + b
    ref_f32 = x @ w.T + b
    assert jnp.allclose(out, ref_bf16, atol=1e-3, rtol=1e-3), "mismatch vs bf16 ref"
    assert jnp.allclose(out, ref_f32, atol=5e-2, rtol=5e-2), "mismatch vs f32 ref"

    # --- small grid case (exercises the tiled path with custom tiles) --------
    B2, H2 = 16, 256
    bound2 = 1.0 / jnp.sqrt(jnp.float32(H2))
    w2 = jax.random.uniform(k_w2, (H2, H2), jnp.float32, -bound2, bound2)
    b2 = jax.random.uniform(k_b2, (H2,), jnp.float32, -bound2, bound2)
    x2 = jax.random.normal(k_x2, (B2, H2), jnp.float32)

    out2 = theta_forward(x2, w2, b2, tm=16, tn=128, tk=128)   # grid (1, 2, 2)
    jax.block_until_ready(out2)
    assert out2.shape == (B2, H2) and out2.dtype == jnp.float32

    ref2_bf16 = jnp.dot(x2.astype(jnp.bfloat16).astype(jnp.float32),
                        w2.T.astype(jnp.bfloat16).astype(jnp.float32)) + b2
    assert jnp.allclose(out2, ref2_bf16, atol=2e-3, rtol=2e-3), "tiled: bf16 ref"
    assert jnp.allclose(out2, x2 @ w2.T + b2, atol=8e-2, rtol=8e-2), "tiled: f32 ref"

    print("KERNEL_OK")
</pallas_src>

<mosaic_0001>
module attributes {stable_mosaic.version = 11 : i64} {
  func.func @_theta_single_kernel(%arg0: memref<16x128xbf16, #tpu.memory_space<vmem>>, %arg1: memref<128x128xbf16, #tpu.memory_space<vmem>>, %arg2: memref<1x128xf32, #tpu.memory_space<vmem>>, %arg3: memref<16x128xf32, #tpu.memory_space<vmem>>) attributes {dimension_semantics = [], scalar_prefetch = 0 : i64, scratch_operands = 0 : i64, tpu.core_type = #tpu.core_type<tc>} {
    %c0 = arith.constant 0 : index
    %c0_0 = arith.constant 0 : index
    %0 = vector.load %arg0[%c0, %c0_0] : memref<16x128xbf16, #tpu.memory_space<vmem>>, vector<16x128xbf16>
    %c0_1 = arith.constant 0 : index
    %c0_2 = arith.constant 0 : index
    %1 = vector.load %arg1[%c0_1, %c0_2] : memref<128x128xbf16, #tpu.memory_space<vmem>>, vector<128x128xbf16>
    %cst = arith.constant dense<0.000000e+00> : vector<16x128xf32>
    %2 = tpu.matmul %0, %1, %cst {dimension_numbers = #tpu.dot_dimension_numbers<[1], [0], [0], [1], [0, 0, 1, 1], [], []>} : vector<16x128xbf16>, vector<128x128xbf16>, vector<16x128xf32> -> vector<16x128xf32>
    %c0_3 = arith.constant 0 : index
    %c0_4 = arith.constant 0 : index
    %3 = vector.load %arg2[%c0_3, %c0_4] : memref<1x128xf32, #tpu.memory_space<vmem>>, vector<1x128xf32>
    %4 = vector.broadcast %3 : vector<1x128xf32> to vector<16x128xf32>
    %5 = arith.addf %2, %4 : vector<16x128xf32>
    %c0_5 = arith.constant 0 : index
    %c0_6 = arith.constant 0 : index
    %6 = vector.load %arg3[%c0_5, %c0_6] : memref<16x128xf32, #tpu.memory_space<vmem>>, vector<16x128xf32>
    tpu.vector_store %arg3[%c0_5, %c0_6], %5 {strides = array<i32>} : memref<16x128xf32, #tpu.memory_space<vmem>>, vector<16x128xf32>,
    return
  }
}

</mosaic_0001>

<llo_original>
// kernel: tpu_custom_call.1
$region0: #{tpu_custom_call.1}
  #allocation0 [shape = 'u32[]', space=smem, size = 0x4, offset = 0x4, fixed_abs, tag = 'smem constant byte address 0x4 - core index']
  #allocation1 [shape = 'u32[72,128]{1,0:T(1,128)}', space=vmem, size = 0x9000, scoped, tag = 'internal scratch']
  %s0 = inlined_call_operand.hbm [shape: bf16[16,128], index: 0, kind: input, shape index: {}]
  %s1 = inlined_call_operand.hbm [shape: bf16[128,128], index: 1, kind: input, shape index: {}]
  %s2 = inlined_call_operand.vmem [shape: f32[1,128], index: 2, kind: input, shape index: {}]
  %s3 = inlined_call_operand.hbm [shape: f32[16,128], index: 3, kind: output, shape index: {}]
  %s4 = sld [smem:[#allocation0]]
  $region30: #{tpu_custom_call.1} parent=0
    _
  %s6 = ssub.s32 1, %s4
  %s7 = scalar_select 0, %s6, %s4
  $region1: #{tpu_custom_call.1} parent=0
    #allocation2 [shape = 'u8[4096]{0}', space=vmem, size = 0x1000, scoped, tag = 'input window, operand 0, single buffered']
    #allocation3 [shape = 's32[1]{0}', space=sflag, size = 0x4, scoped, tag = 'scoped memory for tpu_custom_call.1']
    #allocation4 [shape = 's32[1]{0}', space=sflag, size = 0x4, scoped, tag = 'scoped memory for tpu_custom_call.1']
    #allocation5 [shape = 'u8[32768]{0}', space=vmem, size = 0x8000, scoped, tag = 'input window, operand 1, single buffered']
    #allocation6 [shape = 's32[1]{0}', space=sflag, size = 0x4, scoped, tag = 'scoped memory for tpu_custom_call.1']
    #allocation7 [shape = 'u8[8192]{0}', space=vmem, size = 0x2000, scoped, tag = 'output window, operand 0, single buffered']
    %8 = vsyncpa [#allocation3], 0
    %9 = vsyncpa [#allocation6], 0
    %10 = vsyncpa [#allocation4], 0
    // Predicated region
    $region2: #{tpu_custom_call.1} parent=1 // pred_check
      _
    $region3: #{tpu_custom_call.1} parent=1 // pred_check_branch
      %12 = sbr.rel (0) target = $region5
    $region4: #{tpu_custom_call.1} parent=1 // pred_region
      %14 = vsyncadd [#allocation3], 0
      %s15 = sshll.u32 %s0, 4
      %s16 = int_to_ptr.hbm [resolvable:$true] %s15
      %s17 = sshll.u32 [#allocation2], 4
      %s18 = int_to_ptr.vmem [resolvable:$true] %s17
      %23 = dma.hbm_to_vmem [thread:$0]  %s16, 128, %s18, [#allocation3], 64, 64, 4
    $region5: #{tpu_custom_call.1} parent=1 // pred_fallthru
      _
    // Predicated region
    $region6: #{tpu_custom_call.1} parent=1 // pred_check
      _
    $region7: #{tpu_custom_call.1} parent=1 // pred_check_branch
      %25 = sbr.rel (0) target = $region9
    $region8: #{tpu_custom_call.1} parent=1 // pred_region
      %27 = vsyncadd [#allocation6], 0
      %s28 = sshll.u32 %s1, 4
      %s29 = int_to_ptr.hbm [resolvable:$true] %s28
      %s30 = sshll.u32 [#allocation5], 4
      %s31 = int_to_ptr.vmem [resolvable:$true] %s30
      %36 = dma.hbm_to_vmem [thread:$0]  %s29, 1024, %s31, [#allocation6], 64, 64, 4
    $region9: #{tpu_custom_call.1} parent=1 // pred_fallthru
      _
    // Predicated region
    $region10: #{tpu_custom_call.1} parent=1 // pred_check
      _
    $region11: #{tpu_custom_call.1} parent=1 // pred_check_branch
      %38 = sbr.rel (0) target = $region13
    $region12: #{tpu_custom_call.1} parent=1 // pred_region
      _
    $region13: #{tpu_custom_call.1} parent=1 // pred_fallthru
      _
    // Predicated region
    $region14: #{tpu_custom_call.1} parent=1 // pred_check
      _
    $region15: #{tpu_custom_call.1} parent=1 // pred_check_branch
      %40 = sbr.rel (0) target = $region17
    $region16: #{tpu_custom_call.1} parent=1 // pred_region
      %42 = dma.done [#allocation3], 128
    $region17: #{tpu_custom_call.1} parent=1 // pred_fallthru
      _
    // Predicated region
    $region18: #{tpu_custom_call.1} parent=1 // pred_check
      _
    $region19: #{tpu_custom_call.1} parent=1 // pred_check_branch
      %44 = sbr.rel (0) target = $region21
    $region20: #{tpu_custom_call.1} parent=1 // pred_region
      %46 = dma.done [#allocation6], 1024
    $region21: #{tpu_custom_call.1} parent=1 // pred_fallthru
      _
    %v47 = vld [vmem:[#allocation2] sm:$0xf]
    %v48 = vld [vmem:[#allocation2 + $0x4] sm:$0xf]
    %v49 = vld [vmem:[#allocation5] sm:$0xf]
    %v50 = vld [vmem:[#allocation5 + $0x4] sm:$0xf]
    %v51 = vld [vmem:[#allocation5 + $0x8] sm:$0xf]
    %v52 = vld [vmem:[#allocation5 + $0xc] sm:$0xf]
    %v53 = vld [vmem:[#allocation5 + $0x10] sm:$0xf]
    %v54 = vld [vmem:[#allocation5 + $0x14] sm:$0xf]
    %v55 = vld [vmem:[#allocation5 + $0x18] sm:$0xf]
    %v56 = vld [vmem:[#allocation5 + $0x1c] sm:$0xf]
    %v57 = vld [vmem:[#allocation5 + $0x20] sm:$0xf]
    %v58 = vld [vmem:[#allocation5 + $0x24] sm:$0xf]
    %v59 = vld [vmem:[#allocation5 + $0x28] sm:$0xf]
    %v60 = vld [vmem:[#allocation5 + $0x2c] sm:$0xf]
    %v61 = vld [vmem:[#allocation5 + $0x30] sm:$0xf]
    %v62 = vld [vmem:[#allocation5 + $0x34] sm:$0xf]
    %v63 = vld [vmem:[#allocation5 + $0x38] sm:$0xf]
    %v64 = vld [vmem:[#allocation5 + $0x3c] sm:$0xf]
    %v65 = vld [vmem:[%s2] sm:$0x1]
    %v67 = vperm.slane %v65, 0
    %v71 = vunpack.c.l.b16 %v47
    %v72 = vunpack.c.l.b16 %v48
    %v73 = vpack.c.b16 %v72, %v71
    %v91 = vunpack.c.l.b16 %v49
    %v92 = vunpack.c.l.b16 %v50
    %v93 = vunpack.c.l.b16 %v51
    %v94 = vunpack.c.l.b16 %v52
    %v95 = vunpack.c.l.b16 %v53
    %v96 = vunpack.c.l.b16 %v54
    %v97 = vunpack.c.l.b16 %v55
    %v98 = vunpack.c.l.b16 %v56
    %v99 = vunpack.c.l.b16 %v57
    %v100 = vunpack.c.l.b16 %v58
    %v101 = vunpack.c.l.b16 %v59
    %v102 = vunpack.c.l.b16 %v60
    %v103 = vunpack.c.l.b16 %v61
    %v104 = vunpack.c.l.b16 %v62
    %v105 = vunpack.c.l.b16 %v63
    %v106 = vunpack.c.l.b16 %v64
    %v107 = vpack.c.b16 %v92, %v91
    %v108 = vpack.c.b16 %v94, %v93
    %v109 = vpack.c.b16 %v96, %v95
    %v110 = vpack.c.b16 %v98, %v97
    %v111 = vpack.c.b16 %v100, %v99
    %v112 = vpack.c.b16 %v102, %v101
    %v113 = vpack.c.b16 %v104, %v103
    %v114 = vpack.c.b16 %v106, %v105
    %123 = vmatpush.bf16.msra.mxu0 %v114
    %124 = vmatpush.bf16.msra.mxu0 %v113
    %125 = vmatpush.bf16.msra.mxu0 %v112
    %126 = vmatpush.bf16.msra.mxu0 %v111
    %127 = vmatpush.bf16.msra.mxu0 %v110
    %128 = vmatpush.bf16.msra.mxu0 %v109
    %129 = vmatpush.bf16.msra.mxu0 %v108
    %130 = vmatpush.bf16.msra.mxu0 %v107
    %131 = vmatmul.bf16.gmra.mxu0 %v73
    %v132 = vpop.f32.mrf.mxu0
    %v133 = vadd.f32 %v67, %v132
    %v134 = vpop.f32.mrf.mxu0
    %v135 = vadd.f32 %v67, %v134
    %136 = vdwg.mxu0
    %137 = vst [vmem:[#allocation7] sm:$0xff] %v133
    %138 = vst [vmem:[#allocation7 + $0x8] sm:$0xff] %v135
    // Predicated region
    $region22: #{tpu_custom_call.1} parent=1 // pred_check
      _
    $region23: #{tpu_custom_call.1} parent=1 // pred_check_branch
      %140 = sbr.rel (0) target = $region25
    $region24: #{tpu_custom_call.1} parent=1 // pred_region
      %142 = vsyncadd [#allocation4], 0
      %s143 = sshll.u32 [#allocation7], 4
      %s144 = int_to_ptr.vmem [resolvable:$true] %s143
      %s145 = sshll.u32 %s3, 4
      %s146 = int_to_ptr.hbm [resolvable:$true] %s145
      %151 = dma.vmem_to_hbm [thread:$0]  %s144, 256, %s146, [#allocation4], 128, 128, 8
    $region25: #{tpu_custom_call.1} parent=1 // pred_fallthru
      _
    // Predicated region
    $region26: #{tpu_custom_call.1} parent=1 // pred_check
      _
    $region27: #{tpu_custom_call.1} parent=1 // pred_check_branch
      %153 = sbr.rel (0) target = $region29
    $region28: #{tpu_custom_call.1} parent=1 // pred_region
      %155 = dma.done [#allocation4], 256
    $region29: #{tpu_custom_call.1} parent=1 // pred_fallthru
      _
    %156 = vsyncpa [#allocation3], 1
    %157 = vsyncpa [#allocation6], 1
    %158 = vsyncpa [#allocation4], 1

</llo_original>
